<compile_context>
chip_gen: v7x
topology: tpu7x:2x2x1
jax: 0.10.0
libtpu: 0.0.40
codegen_flags: <defaults>
</compile_context>

<pallas_src>
import jax
import jax.numpy as jnp
from jax import lax
from jax.experimental import pallas as pl
from jax.experimental.pallas import tpu as pltpu


def _vmem_caps():
    """(per-step working-set budget, scoped vmem limit) in bytes."""
    try:
        cap = int(pltpu.get_tpu_info().vmem_capacity_bytes)
    except Exception:
        cap = 64 * 1024 * 1024          # safe fallback (v7x physical VMEM)
    return int(cap * 0.40), int(cap * 0.75)


def _pick_tiles(H, W, CK, CP, budget, max_tile_rows=None, max_cpt=None):
    """Pick row tile TH (divides H; TH==H or TH*W % 128 == 0 so output blocks are
    lane-dense) and channel tile CPT (divides CP, multiple of 8) so the per-step
    working set fits the VMEM budget."""
    def step_bytes(th, cpt):
        L = th * W
        R = L + 2 * W + 2
        return (2 * CK * R * 2          # double-buffered bf16 input slab
                + 2 * CK * R * 2        # in-kernel left/right masked slab copies
                + 2 * cpt * 9 * CK * 2  # double-buffered bf16 weight block
                + 2 * R * 4             # column-index vector
                + 9 * CK * L * 2        # stacked-shift VMEM scratch (matmul RHS)
                + 2 * cpt * L * 4       # double-buffered f32 output block
                + 2 * cpt * L * 4)      # matmul result + post-BN value

    ths = [H] + [t for t in range(H - 1, 0, -1)
                 if H % t == 0 and (t * W) % 128 == 0]
    if max_tile_rows is not None:
        ths = [t for t in ths if t <= max_tile_rows] or [ths[-1]]
    cpts = [c for c in range(CP, 0, -8) if CP % c == 0]
    if max_cpt is not None:
        cpts = [c for c in cpts if c <= max_cpt] or [8]

    for th in ths:                      # prefer large spatial tiles (fewer steps)
        for cpt in cpts:
            if step_bytes(th, cpt) <= budget:
                return th, cpt
    # TODO(synk): remainder-block handling for H with no (8,128)-legal divisor;
    # fall back to the smallest legal combination and let vmem_limit absorb it.
    return ths[-1], cpts[-1]


def de_conv_bn_act(x_nchw, weight, bias, gamma, beta, *, eps=1e-5,
                   compute_dtype=jnp.bfloat16, max_tile_rows=None, max_cpt=None):
    """Conv2d(3x3, s=1, p=1, bias) + BatchNorm2d(train mode) + LeakyReLU(0.2).

    x_nchw: (N, Cin, H, W) f32; weight: (Cout, Cin, 3, 3); bias/gamma/beta: (Cout,)
    Returns (N, Cout, H, W) f32.  The conv bias is folded away: under train-mode
    batch-statistics BN it cancels exactly (the batch mean absorbs it).
    """
    N, Cin, H, W = x_nchw.shape
    Cout, wcin, Kh, Kw = weight.shape
    assert (Kh, Kw) == (3, 3) and wcin == Cin

    CK = -(-Cin // 16) * 16              # Cin padded for bf16 sublane packing
    CP = -(-Cout // 8) * 8               # Cout padded to a sublane multiple

    budget, vmem_limit = _vmem_caps()
    TH, CPT = _pick_tiles(H, W, CK, CP, budget, max_tile_rows, max_cpt)
    HB = H // TH                         # row blocks
    CB = CP // CPT                       # output-channel blocks
    L = TH * W                           # dense output lanes per block
    R = L + 2 * W + 2                    # slab window (row halo + 1-elem end pads)

    # ---- glue: height-padded, row-stride-W flattened bf16 slabs ------------------
    x = x_nchw.astype(compute_dtype)
    xp = jnp.pad(x, ((0, 0), (0, CK - Cin), (1, 1), (0, 0)))        # (N,CK,H+2,W)
    g = jnp.pad(xp.reshape(N, CK, (H + 2) * W), ((0, 0), (0, 0), (1, 1)))
    if HB == 1:
        slabs = g[:, None]                                          # (N,1,CK,R)
    else:
        # TODO(synk): replace this glue-side halo gather with an in-kernel
        # memory_space=pl.ANY + make_async_copy double buffer for huge images.
        idx = (jnp.arange(HB) * L)[:, None] + jnp.arange(R)[None, :]
        slabs = jnp.transpose(jnp.take(g, idx, axis=2), (0, 2, 1, 3))

    # weights as (CB, CPT, 9*CK): column block t = kh*3+kw holds tap (kh,kw)
    w_taps = jnp.transpose(weight, (2, 3, 0, 1)).reshape(9, Cout, Cin)
    w_taps = jnp.pad(w_taps, ((0, 0), (0, CP - Cout), (0, CK - Cin)))
    w_mat = jnp.transpose(w_taps, (1, 0, 2)).reshape(CB, CPT, 9 * CK)
    w_mat = w_mat.astype(compute_dtype)

    # column-within-row index of every slab position (same for every row block)
    qmod = (jnp.arange(R, dtype=jnp.int32) % W).reshape(1, R)

    def conv_block(x_ref, w_ref, q_ref, stack_ref):
        """Fused 3x3 conv of one block as a single (CPT,9CK)x(9CK,L) MXU matmul."""
        xs = x_ref[0, 0]                                   # (CK, R) bf16
        q = q_ref[...]                                     # (1, R)  int32
        xs_l = jnp.where(q != 0, xs, 0)    # kw=0 taps: zero left-edge wrap lanes
        xs_r = jnp.where(q != 1, xs, 0)    # kw=2 taps: zero right-edge wrap lanes
        for kh in range(3):
            b = kh * W
            t = kh * 3
            stack_ref[(t + 0) * CK:(t + 1) * CK, :] = xs_l[:, b:b + L]
            stack_ref[(t + 1) * CK:(t + 2) * CK, :] = xs[:, b + 1:b + 1 + L]
            stack_ref[(t + 2) * CK:(t + 3) * CK, :] = xs_r[:, b + 2:b + 2 + L]
        return jnp.dot(w_ref[0], stack_ref[...],
                       preferred_element_type=jnp.float32)  # (CPT, L) f32

    # ---- kernel 1: conv + partial BN statistics (no conv writeback) --------------
    def stats_kernel(x_ref, w_ref, q_ref, sum_ref, sq_ref, stack_ref):
        acc = conv_block(x_ref, w_ref, q_ref, stack_ref)
        sum_ref[0, 0] = jnp.broadcast_to(
            jnp.sum(acc, axis=1, keepdims=True), (CPT, 128))
        sq_ref[0, 0] = jnp.broadcast_to(
            jnp.sum(acc * acc, axis=1, keepdims=True), (CPT, 128))

    sums, sqs = pl.pallas_call(
        stats_kernel,
        out_shape=(jax.ShapeDtypeStruct((N, HB, CP, 128), jnp.float32),
                   jax.ShapeDtypeStruct((N, HB, CP, 128), jnp.float32)),
        grid_spec=pltpu.PrefetchScalarGridSpec(
            num_scalar_prefetch=0,
            grid=(N, HB, CB),
            in_specs=[
                pl.BlockSpec((1, 1, CK, R), lambda n, hb, cb: (n, hb, 0, 0)),
                pl.BlockSpec((1, CPT, 9 * CK), lambda n, hb, cb: (cb, 0, 0)),
                pl.BlockSpec((1, R), lambda n, hb, cb: (0, 0)),
            ],
            out_specs=[
                pl.BlockSpec((1, 1, CPT, 128), lambda n, hb, cb: (n, hb, cb, 0)),
                pl.BlockSpec((1, 1, CPT, 128), lambda n, hb, cb: (n, hb, cb, 0)),
            ],
            scratch_shapes=[pltpu.VMEM((9 * CK, L), compute_dtype)]),
        compiler_params=pltpu.CompilerParams(
            dimension_semantics=("parallel", "parallel", "parallel"),
            vmem_limit_bytes=vmem_limit),
    )(slabs, w_mat, qmod)

    # ---- glue: BN scale/shift from the partial statistics ------------------------
    count = jnp.float32(N * H * W)
    ch_sum = jnp.sum(sums[..., 0], axis=(0, 1))[:Cout]
    ch_sq = jnp.sum(sqs[..., 0], axis=(0, 1))[:Cout]
    mean = ch_sum / count
    # TODO(synk): E[x^2]-E[x]^2 in f32 can cancel for |mean| >> std inputs; a
    # per-block-centered formulation would need a third pass over the data.
    var = jnp.maximum(ch_sq / count - mean * mean, 0.0)  # biased, as PyTorch BN fwd
    scale = gamma.astype(jnp.float32) * lax.rsqrt(var + eps)
    shift = beta.astype(jnp.float32) - mean * scale
    scale_b = jnp.pad(scale, (0, CP - Cout)).reshape(CB, CPT, 1)
    shift_b = jnp.pad(shift, (0, CP - Cout)).reshape(CB, CPT, 1)

    # ---- kernel 2: recompute conv, BN affine + LeakyReLU, lane-dense NCHW store --
    def bn_act_kernel(x_ref, w_ref, q_ref, scale_ref, shift_ref, out_ref, stack_ref):
        acc = conv_block(x_ref, w_ref, q_ref, stack_ref)
        v = acc * scale_ref[0] + shift_ref[0]
        out_ref[0] = jnp.where(v > 0, v, 0.2 * v)

    y_flat = pl.pallas_call(
        bn_act_kernel,
        out_shape=jax.ShapeDtypeStruct((N, CP, H * W), jnp.float32),
        grid_spec=pltpu.PrefetchScalarGridSpec(
            num_scalar_prefetch=0,
            grid=(N, HB, CB),
            in_specs=[
                pl.BlockSpec((1, 1, CK, R), lambda n, hb, cb: (n, hb, 0, 0)),
                pl.BlockSpec((1, CPT, 9 * CK), lambda n, hb, cb: (cb, 0, 0)),
                pl.BlockSpec((1, R), lambda n, hb, cb: (0, 0)),
                pl.BlockSpec((1, CPT, 1), lambda n, hb, cb: (cb, 0, 0)),
                pl.BlockSpec((1, CPT, 1), lambda n, hb, cb: (cb, 0, 0)),
            ],
            out_specs=pl.BlockSpec((1, CPT, L), lambda n, hb, cb: (n, cb, hb)),
            scratch_shapes=[pltpu.VMEM((9 * CK, L), compute_dtype)]),
        compiler_params=pltpu.CompilerParams(
            dimension_semantics=("parallel", "parallel", "parallel"),
            vmem_limit_bytes=vmem_limit),
    )(slabs, w_mat, qmod, scale_b, shift_b)

    return y_flat.reshape(N, CP, H, W)[:, :Cout]   # drop channel padding (free if ==)


# ---------------------------------------------------------------------------------
# Pure-JAX reference (same bf16 operands / f32 accumulation as the Pallas path)
# ---------------------------------------------------------------------------------
def _reference(x_nchw, weight, bias, gamma, beta, eps=1e-5,
               compute_dtype=jnp.bfloat16):
    conv = lax.conv_general_dilated(
        x_nchw.astype(compute_dtype), weight.astype(compute_dtype),
        window_strides=(1, 1), padding=((1, 1), (1, 1)),
        dimension_numbers=("NCHW", "OIHW", "NCHW"),
        preferred_element_type=jnp.float32)
    conv = conv + bias.reshape(1, -1, 1, 1)
    mean = jnp.mean(conv, axis=(0, 2, 3), keepdims=True)
    var = jnp.mean((conv - mean) ** 2, axis=(0, 2, 3), keepdims=True)
    y = (conv - mean) / jnp.sqrt(var + eps)
    y = y * gamma.reshape(1, -1, 1, 1) + beta.reshape(1, -1, 1, 1)
    return jnp.where(y > 0, y, 0.2 * y)


def _run_case(key, N, Cin, Cout, H, W, **kw):
    k_x, k_w, k_b, k_g, k_e = jax.random.split(key, 5)
    x = jax.random.normal(k_x, (N, Cin, H, W), dtype=jnp.float32)
    weight = 0.1 * jax.random.normal(k_w, (Cout, Cin, 3, 3), dtype=jnp.float32)
    bias = 0.05 * jax.random.normal(k_b, (Cout,), dtype=jnp.float32)
    gamma = 1.0 + 0.1 * jax.random.normal(k_g, (Cout,), dtype=jnp.float32)
    beta = 0.1 * jax.random.normal(k_e, (Cout,), dtype=jnp.float32)

    out = jax.block_until_ready(de_conv_bn_act(x, weight, bias, gamma, beta, **kw))
    ref = _reference(x, weight, bias, gamma, beta)
    assert out.shape == (N, Cout, H, W)
    err = float(jnp.max(jnp.abs(out - ref)))
    # identical bf16 operands on both paths: tolerance only covers accumulation
    # order / variance-formulation differences.
    assert err < 3e-3, f"Pallas output mismatch vs reference: {err}"
    return err


if __name__ == "__main__":
    key = jax.random.PRNGKey(0)
    k1, k2 = jax.random.split(key)
    # Default path: whole image + all channels per grid step (HB=1, CB=1).
    _run_case(k1, N=2, Cin=4, Cout=8, H=16, W=16)
    # Force small tiles to also exercise the row-block (halo) and channel-block paths.
    _run_case(k2, N=2, Cin=4, Cout=16, H=32, W=16, max_tile_rows=8, max_cpt=8)
    print("KERNEL_OK")
</pallas_src>

<mosaic_0001>
module attributes {stable_mosaic.version = 11 : i64} {
  func.func @stats_kernel(%arg0: i32, %arg1: i32, %arg2: i32, %arg3: memref<1x1x16x290xbf16, #tpu.memory_space<vmem>>, %arg4: memref<1x8x144xbf16, #tpu.memory_space<vmem>>, %arg5: memref<1x290xi32, #tpu.memory_space<vmem>>, %arg6: memref<1x1x8x128xf32, #tpu.memory_space<vmem>>, %arg7: memref<1x1x8x128xf32, #tpu.memory_space<vmem>>, %arg8: memref<144x256xbf16, #tpu.memory_space<vmem>>) attributes {dimension_semantics = [#tpu.dimension_semantics<parallel>, #tpu.dimension_semantics<parallel>, #tpu.dimension_semantics<parallel>], iteration_bounds = array<i64: 2, 1, 1>, scalar_prefetch = 0 : i64, scratch_operands = 1 : i64, tpu.core_type = #tpu.core_type<tc>, window_params = [{transform_indices = @transform_0, window_bounds = array<i64: 1, 1, 16, 290>}, {transform_indices = @transform_1, window_bounds = array<i64: 1, 8, 144>}, {pipeline_mode = #tpu.pipeline_mode<synchronous>, transform_indices = @transform_2, window_bounds = array<i64: 1, 290>}, {transform_indices = @transform_3, window_bounds = array<i64: 1, 1, 8, 128>}, {transform_indices = @transform_4, window_bounds = array<i64: 1, 1, 8, 128>}]} {
    %c0 = arith.constant 0 : index
    %c0_0 = arith.constant 0 : index
    %c0_1 = arith.constant 0 : index
    %c0_2 = arith.constant 0 : index
    %0 = vector.load %arg3[%c0, %c0_0, %c0_1, %c0_2] : memref<1x1x16x290xbf16, #tpu.memory_space<vmem>>, vector<1x1x16x290xbf16>
    %1 = vector.shape_cast %0 : vector<1x1x16x290xbf16> to vector<16x290xbf16>
    %c0_3 = arith.constant 0 : index
    %c0_4 = arith.constant 0 : index
    %2 = vector.load %arg5[%c0_3, %c0_4] : memref<1x290xi32, #tpu.memory_space<vmem>>, vector<1x290xi32>
    %c0_i32 = arith.constant 0 : i32
    %3 = vector.broadcast %c0_i32 : i32 to vector<1x290xi32>
    %4 = arith.cmpi ne, %2, %3 : vector<1x290xi32>
    %c0_i32_5 = arith.constant 0 : i32
    %5 = arith.sitofp %c0_i32_5 : i32 to bf16
    %6 = vector.shape_cast %4 : vector<1x290xi1> to vector<1x290xi1>
    %7 = vector.broadcast %6 : vector<1x290xi1> to vector<16x290xi1>
    %8 = vector.broadcast %5 : bf16 to vector<16x290xbf16>
    %9 = arith.select %7, %1, %8 : vector<16x290xi1>, vector<16x290xbf16>
    %c1_i32 = arith.constant 1 : i32
    %10 = vector.broadcast %c1_i32 : i32 to vector<1x290xi32>
    %11 = arith.cmpi ne, %2, %10 : vector<1x290xi32>
    %c0_i32_6 = arith.constant 0 : i32
    %12 = arith.sitofp %c0_i32_6 : i32 to bf16
    %13 = vector.shape_cast %11 : vector<1x290xi1> to vector<1x290xi1>
    %14 = vector.broadcast %13 : vector<1x290xi1> to vector<16x290xi1>
    %15 = vector.broadcast %12 : bf16 to vector<16x290xbf16>
    %16 = arith.select %14, %1, %15 : vector<16x290xi1>, vector<16x290xbf16>
    %17 = vector.extract_strided_slice %9 {offsets = [0, 0], sizes = [16, 256], strides = [1, 1]} : vector<16x290xbf16> to vector<16x256xbf16>
    %c0_7 = arith.constant 0 : index
    %c0_8 = arith.constant 0 : index
    %18 = vector.load %arg8[%c0_7, %c0_8] : memref<144x256xbf16, #tpu.memory_space<vmem>>, vector<16x256xbf16>
    tpu.vector_store %arg8[%c0_7, %c0_8], %17 {strides = array<i32>} : memref<144x256xbf16, #tpu.memory_space<vmem>>, vector<16x256xbf16>,
    %19 = vector.extract_strided_slice %1 {offsets = [0, 1], sizes = [16, 256], strides = [1, 1]} : vector<16x290xbf16> to vector<16x256xbf16>
    %c16 = arith.constant 16 : index
    %c0_9 = arith.constant 0 : index
    %20 = vector.load %arg8[%c16, %c0_9] : memref<144x256xbf16, #tpu.memory_space<vmem>>, vector<16x256xbf16>
    tpu.vector_store %arg8[%c16, %c0_9], %19 {strides = array<i32>} : memref<144x256xbf16, #tpu.memory_space<vmem>>, vector<16x256xbf16>,
    %21 = vector.extract_strided_slice %16 {offsets = [0, 2], sizes = [16, 256], strides = [1, 1]} : vector<16x290xbf16> to vector<16x256xbf16>
    %c32 = arith.constant 32 : index
    %c0_10 = arith.constant 0 : index
    %22 = vector.load %arg8[%c32, %c0_10] : memref<144x256xbf16, #tpu.memory_space<vmem>>, vector<16x256xbf16>
    tpu.vector_store %arg8[%c32, %c0_10], %21 {strides = array<i32>} : memref<144x256xbf16, #tpu.memory_space<vmem>>, vector<16x256xbf16>,
    %23 = vector.extract_strided_slice %9 {offsets = [0, 16], sizes = [16, 256], strides = [1, 1]} : vector<16x290xbf16> to vector<16x256xbf16>
    %c48 = arith.constant 48 : index
    %c0_11 = arith.constant 0 : index
    %24 = vector.load %arg8[%c48, %c0_11] : memref<144x256xbf16, #tpu.memory_space<vmem>>, vector<16x256xbf16>
    tpu.vector_store %arg8[%c48, %c0_11], %23 {strides = array<i32>} : memref<144x256xbf16, #tpu.memory_space<vmem>>, vector<16x256xbf16>,
    %25 = vector.extract_strided_slice %1 {offsets = [0, 17], sizes = [16, 256], strides = [1, 1]} : vector<16x290xbf16> to vector<16x256xbf16>
    %c64 = arith.constant 64 : index
    %c0_12 = arith.constant 0 : index
    %26 = vector.load %arg8[%c64, %c0_12] : memref<144x256xbf16, #tpu.memory_space<vmem>>, vector<16x256xbf16>
    tpu.vector_store %arg8[%c64, %c0_12], %25 {strides = array<i32>} : memref<144x256xbf16, #tpu.memory_space<vmem>>, vector<16x256xbf16>,
    %27 = vector.extract_strided_slice %16 {offsets = [0, 18], sizes = [16, 256], strides = [1, 1]} : vector<16x290xbf16> to vector<16x256xbf16>
    %c80 = arith.constant 80 : index
    %c0_13 = arith.constant 0 : index
    %28 = vector.load %arg8[%c80, %c0_13] : memref<144x256xbf16, #tpu.memory_space<vmem>>, vector<16x256xbf16>
    tpu.vector_store %arg8[%c80, %c0_13], %27 {strides = array<i32>} : memref<144x256xbf16, #tpu.memory_space<vmem>>, vector<16x256xbf16>,
    %29 = vector.extract_strided_slice %9 {offsets = [0, 32], sizes = [16, 256], strides = [1, 1]} : vector<16x290xbf16> to vector<16x256xbf16>
    %c96 = arith.constant 96 : index
    %c0_14 = arith.constant 0 : index
    %30 = vector.load %arg8[%c96, %c0_14] : memref<144x256xbf16, #tpu.memory_space<vmem>>, vector<16x256xbf16>
    tpu.vector_store %arg8[%c96, %c0_14], %29 {strides = array<i32>} : memref<144x256xbf16, #tpu.memory_space<vmem>>, vector<16x256xbf16>,
    %31 = vector.extract_strided_slice %1 {offsets = [0, 33], sizes = [16, 256], strides = [1, 1]} : vector<16x290xbf16> to vector<16x256xbf16>
    %c112 = arith.constant 112 : index
    %c0_15 = arith.constant 0 : index
    %32 = vector.load %arg8[%c112, %c0_15] : memref<144x256xbf16, #tpu.memory_space<vmem>>, vector<16x256xbf16>
    tpu.vector_store %arg8[%c112, %c0_15], %31 {strides = array<i32>} : memref<144x256xbf16, #tpu.memory_space<vmem>>, vector<16x256xbf16>,
    %33 = vector.extract_strided_slice %16 {offsets = [0, 34], sizes = [16, 256], strides = [1, 1]} : vector<16x290xbf16> to vector<16x256xbf16>
    %c128 = arith.constant 128 : index
    %c0_16 = arith.constant 0 : index
    %34 = vector.load %arg8[%c128, %c0_16] : memref<144x256xbf16, #tpu.memory_space<vmem>>, vector<16x256xbf16>
    tpu.vector_store %arg8[%c128, %c0_16], %33 {strides = array<i32>} : memref<144x256xbf16, #tpu.memory_space<vmem>>, vector<16x256xbf16>,
    %c0_17 = arith.constant 0 : index
    %c0_18 = arith.constant 0 : index
    %c0_19 = arith.constant 0 : index
    %35 = vector.load %arg4[%c0_17, %c0_18, %c0_19] : memref<1x8x144xbf16, #tpu.memory_space<vmem>>, vector<1x8x144xbf16>
    %36 = vector.shape_cast %35 : vector<1x8x144xbf16> to vector<8x144xbf16>
    %c0_20 = arith.constant 0 : index
    %c0_21 = arith.constant 0 : index
    %37 = vector.load %arg8[%c0_20, %c0_21] : memref<144x256xbf16, #tpu.memory_space<vmem>>, vector<144x256xbf16>
    %cst = arith.constant dense<0.000000e+00> : vector<8x256xf32>
    %38 = tpu.matmul %36, %37, %cst {dimension_numbers = #tpu.dot_dimension_numbers<[1], [0], [0], [1], [0, 0, 1, 1], [], []>} : vector<8x144xbf16>, vector<144x256xbf16>, vector<8x256xf32> -> vector<8x256xf32>
    %cst_22 = arith.constant dense<0.000000e+00> : vector<8xf32>
    %39 = vector.multi_reduction <add>, %38, %cst_22 [1] : vector<8x256xf32> to vector<8xf32>
    %40 = vector.shape_cast %39 : vector<8xf32> to vector<8x1xf32>
    %41 = vector.shape_cast %40 : vector<8x1xf32> to vector<8x1xf32>
    %42 = vector.broadcast %41 : vector<8x1xf32> to vector<8x128xf32>
    %c0_23 = arith.constant 0 : index
    %c0_24 = arith.constant 0 : index
    %c0_25 = arith.constant 0 : index
    %c0_26 = arith.constant 0 : index
    %43 = vector.load %arg6[%c0_23, %c0_24, %c0_25, %c0_26] : memref<1x1x8x128xf32, #tpu.memory_space<vmem>>, vector<1x1x8x128xf32>
    %44 = vector.shape_cast %43 : vector<1x1x8x128xf32> to vector<8x128xf32>
    %45 = vector.shape_cast %42 : vector<8x128xf32> to vector<1x1x8x128xf32>
    tpu.vector_store %arg6[%c0_23, %c0_24, %c0_25, %c0_26], %45 {strides = array<i32>} : memref<1x1x8x128xf32, #tpu.memory_space<vmem>>, vector<1x1x8x128xf32>,
    %46 = arith.mulf %38, %38 : vector<8x256xf32>
    %cst_27 = arith.constant dense<0.000000e+00> : vector<8xf32>
    %47 = vector.multi_reduction <add>, %46, %cst_27 [1] : vector<8x256xf32> to vector<8xf32>
    %48 = vector.shape_cast %47 : vector<8xf32> to vector<8x1xf32>
    %49 = vector.shape_cast %48 : vector<8x1xf32> to vector<8x1xf32>
    %50 = vector.broadcast %49 : vector<8x1xf32> to vector<8x128xf32>
    %c0_28 = arith.constant 0 : index
    %c0_29 = arith.constant 0 : index
    %c0_30 = arith.constant 0 : index
    %c0_31 = arith.constant 0 : index
    %51 = vector.load %arg7[%c0_28, %c0_29, %c0_30, %c0_31] : memref<1x1x8x128xf32, #tpu.memory_space<vmem>>, vector<1x1x8x128xf32>
    %52 = vector.shape_cast %51 : vector<1x1x8x128xf32> to vector<8x128xf32>
    %53 = vector.shape_cast %50 : vector<8x128xf32> to vector<1x1x8x128xf32>
    tpu.vector_store %arg7[%c0_28, %c0_29, %c0_30, %c0_31], %53 {strides = array<i32>} : memref<1x1x8x128xf32, #tpu.memory_space<vmem>>, vector<1x1x8x128xf32>,
    return
  }
  func.func @transform_0(%arg0: i32, %arg1: i32, %arg2: i32) -> (i32, i32, i32, i32) {
    %c0_i32 = arith.constant 0 : i32
    %c0_i32_0 = arith.constant 0 : i32
    %c0_i32_1 = arith.constant 0 : i32
    return %arg0, %arg1, %c0_i32, %c0_i32_0 : i32, i32, i32, i32
  }
  func.func @transform_1(%arg0: i32, %arg1: i32, %arg2: i32) -> (i32, i32, i32) {
    %c0_i32 = arith.constant 0 : i32
    %c0_i32_0 = arith.constant 0 : i32
    %c0_i32_1 = arith.constant 0 : i32
    return %arg2, %c0_i32, %c0_i32_0 : i32, i32, i32
  }
  func.func @transform_2(%arg0: i32, %arg1: i32, %arg2: i32) -> (i32, i32) {
    %c0_i32 = arith.constant 0 : i32
    %c0_i32_0 = arith.constant 0 : i32
    %c0_i32_1 = arith.constant 0 : i32
    return %c0_i32, %c0_i32_0 : i32, i32
  }
  func.func @transform_3(%arg0: i32, %arg1: i32, %arg2: i32) -> (i32, i32, i32, i32) {
    %c0_i32 = arith.constant 0 : i32
    %c0_i32_0 = arith.constant 0 : i32
    return %arg0, %arg1, %arg2, %c0_i32 : i32, i32, i32, i32
  }
  func.func @transform_4(%arg0: i32, %arg1: i32, %arg2: i32) -> (i32, i32, i32, i32) {
    %c0_i32 = arith.constant 0 : i32
    %c0_i32_0 = arith.constant 0 : i32
    return %arg0, %arg1, %arg2, %c0_i32 : i32, i32, i32, i32
  }
}

</mosaic_0001>

<llo_original>
// kernel: tpu_custom_call.1
$region0: #{tpu_custom_call.1}
  #allocation0 [shape = 'u32[]', space=smem, size = 0x4, offset = 0x4, fixed_abs, tag = 'smem constant byte address 0x4 - core index']
  #allocation1 [shape = 'u32[144,128]{1,0:T(1,128)}', space=vmem, size = 0x12000, scoped, tag = 'internal scratch']
  #allocation2 [shape = 'bf16[144,256]{1,0:T(16,128)(2,1)}', space=vmem, size = 0x12000, scoped, tag = 'scratch operand']
  %s0 = inlined_call_operand.hbm [shape: bf16[2,1,16,290], index: 0, kind: input, shape index: {}]
  %s1 = inlined_call_operand.hbm [shape: bf16[1,8,144], index: 1, kind: input, shape index: {}]
  %s2 = inlined_call_operand.vmem [shape: s32[1,290], index: 2, kind: input, shape index: {}]
  %s3 = inlined_call_operand.hbm [shape: f32[2,1,8,128], index: 3, kind: output, shape index: {0}]
  %s4 = inlined_call_operand.hbm [shape: f32[2,1,8,128], index: 4, kind: output, shape index: {1}]
  %5 = xla_tuple %s3, %s4
  %s6 = sld [smem:[#allocation0]]
  $region61: #{tpu_custom_call.1} parent=0
    _
  %s8 = ssub.s32 1, %s6
  %s9 = scalar_select 0, %s8, %s6
  $region1: #{tpu_custom_call.1} parent=0
    #allocation3 [shape = 'u8[24576]{0}', space=vmem, size = 0x6000, scoped, tag = 'input window, operand 0']
    #allocation4 [shape = 's32[2]{0}', space=sflag, size = 0x8, scoped, tag = 'scoped memory for tpu_custom_call.1']
    #allocation5 [shape = 's32[2]{0}', space=sflag, size = 0x8, scoped, tag = 'scoped memory for tpu_custom_call.1']
    #allocation6 [shape = 'u8[4096]{0}', space=vmem, size = 0x1000, scoped, tag = 'input window, operand 1, single buffered']
    #allocation7 [shape = 's32[1]{0}', space=sflag, size = 0x4, scoped, tag = 'scoped memory for tpu_custom_call.1']
    #allocation8 [shape = 'u8[8192]{0}', space=vmem, size = 0x2000, scoped, tag = 'output window, operand 0']
    #allocation9 [shape = 'u8[8192]{0}', space=vmem, size = 0x2000, scoped, tag = 'output window, operand 1']
    #allocation10 [shape = 's32[2]{0}', space=sflag, size = 0x8, scoped, tag = 'scoped memory for tpu_custom_call.1']
    %10 = vsyncpa [#allocation4], 0
    %s11 = scalar_lea.sflag [#allocation4], 1
    %12 = vsyncpa %s11, 0
    %13 = vsyncpa [#allocation7], 0
    %14 = vsyncpa [#allocation5], 0
    %s15 = scalar_lea.sflag [#allocation5], 1
    %16 = vsyncpa %s15, 0
    %17 = vsyncpa [#allocation10], 0
    %s18 = scalar_lea.sflag [#allocation10], 1
    %19 = vsyncpa %s18, 0
    loop: start=0, step=1, limit=4
    $region2: #{tpu_custom_call.1} parent=1 // loop_pre_header
      _
    $region3: #{tpu_custom_call.1} parent=1 // loop_header
      %s21 = sphi 0, %s25
      %p22 = scmp.ge.s32.totalorder %s21, 4
      %s28 = sphi 0, %s47
      %s29 = sphi 0, %s43
      %s30 = sphi 0, %s39
      %s31 = sphi 0, %s28
      %s32 = sphi 0, %s29
      %s33 = sphi 0, %s30
      %s34 = sphi 0, %s31
      %s35 = sphi 0, %s32
      %s36 = sphi 0, %s33
      %s52 = sphi 0, %s54
      %s55 = sphi 0, %s52
      %s56 = sphi 0, %s55
      %s72 = sphi 0, %s56
      %s78 = sphi 0, %s80
      %s81 = sphi 0, %s78
      %s82 = sphi 0, %s81
      %s98 = sphi 0, %s82
      %s102 = sphi 0, %s102
      %s104 = sphi 0, %s102
      %s105 = sphi 0, %s104
      %s119 = sphi 0, %s105
      %s129 = sphi 0, %s131
      %s132 = sphi 0, %s129
      %s133 = sphi 0, %s132
      %s149 = sphi 0, %s133
      %s159 = sphi 0, %s161
      %s162 = sphi 0, %s159
      %s163 = sphi 0, %s162
      %s179 = sphi 0, %s163
    $region4: #{tpu_custom_call.1} parent=1 // loop_header_branch
      %24 = sbr.rel (%p22) target = $region8
    $region5: #{tpu_custom_call.1} parent=1 // loop_body
      %s26 = ssub.s32 %s21, 1
      %s27 = ssub.s32 %s21, 2
      %s37 = sadd.s32 1, %s30
      %p38 = scmp.ge.s32.totalorder %s37, 1
      %s39 = scalar_select %p38, 0, %s37
      %s40 = sadd.s32 1, %s29
      %s41 = scalar_select %p38, %s40, %s29
      %p42 = scmp.ge.s32.totalorder %s41, 1
      %s43 = scalar_select %p42, 0, %s41
      %s44 = sadd.s32 1, %s28
      %s45 = scalar_select %p42, %s44, %s28
      %p46 = scmp.ge.s32.totalorder %s45, 2
      %s47 = scalar_select %p46, 0, %s45
      %s48 = ssub.s32 %s28, %s47
      %s49 = ssub.s32 %s29, %s43
      %s50 = sor.u32 %s48, %s49
      %p51 = scmp.eq.s32.totalorder %s50, 0
      %s53 = sadd.s32 %s52, 1
      %s54 = scalar_select %p51, %s52, %s53
      %p57 = pneg %p51
      %p58 = scmp.eq.s32.totalorder %s21, 1
      %p59 = por %p57, %p58
      %p60 = scmp.ne.s32.totalorder %s52, %s55
      %p61 = scmp.eq.s32.totalorder %s21, 0
      %p62 = por %p60, %p61
      %p63 = scmp.ne.s32.totalorder %s52, %s55
      %p64 = scmp.eq.s32.totalorder %s26, 1
      %p65 = por %p63, %p64
      %p66 = scmp.ne.s32.totalorder %s55, %s56
      %p67 = scmp.eq.s32.totalorder %s26, 0
      %p68 = por %p66, %p67
      %p69 = scmp.ne.s32.totalorder %s55, %s56
      %p70 = scmp.eq.s32.totalorder %s27, 1
      %p71 = por %p69, %p70
      %p73 = scmp.ne.s32.totalorder %s56, %s72
      %p74 = scmp.eq.s32.totalorder %s27, 0
      %p75 = por %p73, %p74
      %s76 = ssub.s32 %s30, %s39
      %p77 = scmp.eq.s32.totalorder %s76, 0
      %s79 = sadd.s32 %s78, 1
      %s80 = scalar_select %p77, %s78, %s79
      %p83 = pneg %p77
      %p84 = scmp.eq.s32.totalorder %s21, 1
      %p85 = por %p83, %p84
      %p86 = scmp.ne.s32.totalorder %s78, %s81
      %p87 = scmp.eq.s32.totalorder %s21, 0
      %p88 = por %p86, %p87
      %p89 = scmp.ne.s32.totalorder %s78, %s81
      %p90 = scmp.eq.s32.totalorder %s26, 1
      %p91 = por %p89, %p90
      %p92 = scmp.ne.s32.totalorder %s81, %s82
      %p93 = scmp.eq.s32.totalorder %s26, 0
      %p94 = por %p92, %p93
      %p95 = scmp.ne.s32.totalorder %s81, %s82
      %p96 = scmp.eq.s32.totalorder %s27, 1
      %p97 = por %p95, %p96
      %p99 = scmp.ne.s32.totalorder %s82, %s98
      %p100 = scmp.eq.s32.totalorder %s27, 0
      %p101 = por %p99, %p100
      %s103 = sadd.s32 %s102, 1
      %p106 = scmp.eq.s32.totalorder %s21, 1
      %p107 = scmp.ne.s32.totalorder %s102, %s104
      %p108 = scmp.eq.s32.totalorder %s21, 0
      %p109 = por %p107, %p108
      %p110 = scmp.ne.s32.totalorder %s102, %s104
      %p111 = scmp.eq.s32.totalorder %s26, 1
      %p112 = por %p110, %p111
      %p113 = scmp.ne.s32.totalorder %s104, %s105
      %p114 = scmp.eq.s32.totalorder %s26, 0
      %p115 = por %p113, %p114
      %p116 = scmp.ne.s32.totalorder %s104, %s105
      %p117 = scmp.eq.s32.totalorder %s27, 1
      %p118 = por %p116, %p117
      %p120 = scmp.ne.s32.totalorder %s105, %s119
      %p121 = scmp.eq.s32.totalorder %s27, 0
      %p122 = por %p120, %p121
      %s123 = ssub.s32 %s28, %s47
      %s124 = ssub.s32 %s29, %s43
      %s125 = sor.u32 %s123, %s124
      %s126 = ssub.s32 %s30, %s39
      %s127 = sor.u32 %s125, %s126
      %p128 = scmp.eq.s32.totalorder %s127, 0
      %s130 = sadd.s32 %s129, 1
      %s131 = scalar_select %p128, %s129, %s130
      %p134 = pneg %p128
      %p135 = scmp.eq.s32.totalorder %s21, 1
      %p136 = por %p134, %p135
      %p137 = scmp.ne.s32.totalorder %s129, %s132
      %p138 = scmp.eq.s32.totalorder %s21, 0
      %p139 = por %p137, %p138
      %p140 = scmp.ne.s32.totalorder %s129, %s132
      %p141 = scmp.eq.s32.totalorder %s26, 1
      %p142 = por %p140, %p141
      %p143 = scmp.ne.s32.totalorder %s132, %s133
      %p144 = scmp.eq.s32.totalorder %s26, 0
      %p145 = por %p143, %p144
      %p146 = scmp.ne.s32.totalorder %s132, %s133
      %p147 = scmp.eq.s32.totalorder %s27, 1
      %p148 = por %p146, %p147
      %p150 = scmp.ne.s32.totalorder %s133, %s149
      %p151 = scmp.eq.s32.totalorder %s27, 0
      %p152 = por %p150, %p151
      %s153 = ssub.s32 %s28, %s47
      %s154 = ssub.s32 %s29, %s43
      %s155 = sor.u32 %s153, %s154
      %s156 = ssub.s32 %s30, %s39
      %s157 = sor.u32 %s155, %s156
      %p158 = scmp.eq.s32.totalorder %s157, 0
      %s160 = sadd.s32 %s159, 1
      %s161 = scalar_select %p158, %s159, %s160
      %p164 = pneg %p158
      %p165 = scmp.eq.s32.totalorder %s21, 1
      %p166 = por %p164, %p165
      %p167 = scmp.ne.s32.totalorder %s159, %s162
      %p168 = scmp.eq.s32.totalorder %s21, 0
      %p169 = por %p167, %p168
      %p170 = scmp.ne.s32.totalorder %s159, %s162
      %p171 = scmp.eq.s32.totalorder %s26, 1
      %p172 = por %p170, %p171
      %p173 = scmp.ne.s32.totalorder %s162, %s163
      %p174 = scmp.eq.s32.totalorder %s26, 0
      %p175 = por %p173, %p174
      %p176 = scmp.ne.s32.totalorder %s162, %s163
      %p177 = scmp.eq.s32.totalorder %s27, 1
      %p178 = por %p176, %p177
      %p180 = scmp.ne.s32.totalorder %s163, %s179
      %p181 = scmp.eq.s32.totalorder %s27, 0
      %p182 = por %p180, %p181
      %p183 = scmp.le.s32.totalorder 1, %s21
      %p184 = scmp.lt.s32.totalorder %s21, 3
      %p185 = pnand %p183, %p184
      %p186 = pneg %p185
      // Predicated region
      $region9: #{tpu_custom_call.1} parent=5 // pred_check
        _
      $region10: #{tpu_custom_call.1} parent=5 // pred_check_branch
        %188 = sbr.rel (%p185) target = $region12
      $region11: #{tpu_custom_call.1} parent=5 // pred_region
        %s189 = ssub.s32 %s21, 1
        // Predicated region
        $region13: #{tpu_custom_call.1} parent=11 // pred_check
          %p190 = pneg %p94
        $region14: #{tpu_custom_call.1} parent=11 // pred_check_branch
          %192 = sbr.rel (%p190) target = $region16
        $region15: #{tpu_custom_call.1} parent=11 // pred_region
          %s194 = ssub.s32 128, 128
          %195 = vsyncadd [#allocation7], %s194
          %s196 = smul.addr %s33, 2
          %s197 = smul.addr %s196, 64
          %s198 = scalar_lea.hbm %s1, %s197
          %s200 = sshll.u32 [#allocation6], 4
          %s201 = int_to_ptr.vmem [resolvable:$true] %s200
          %203 = dma.hbm_to_vmem [thread:$0]  %s198, 128, %s201, [#allocation7]
        $region16: #{tpu_custom_call.1} parent=11 // pred_fallthru
          _
        // Predicated region
        $region17: #{tpu_custom_call.1} parent=11 // pred_check
          %p204 = pneg %p115
        $region18: #{tpu_custom_call.1} parent=11 // pred_check_branch
          %206 = sbr.rel (%p204) target = $region20
        $region19: #{tpu_custom_call.1} parent=11 // pred_region
          _
        $region20: #{tpu_custom_call.1} parent=11 // pred_fallthru
          _
      $region12: #{tpu_custom_call.1} parent=5 // pred_fallthru
        _
      %p207 = scmp.lt.s32.totalorder %s21, 2
      // Predicated region
      $region21: #{tpu_custom_call.1} parent=5 // pred_check
        %p208 = pneg %p207
      $region22: #{tpu_custom_call.1} parent=5 // pred_check_branch
        %210 = sbr.rel (%p208) target = $region24
      $region23: #{tpu_custom_call.1} parent=5 // pred_region
        // Predicated region
        $region25: #{tpu_custom_call.1} parent=23 // pred_check
          %p211 = pneg %p62
        $region26: #{tpu_custom_call.1} parent=23 // pred_check_branch
          %213 = sbr.rel (%p211) target = $region28
        $region27: #{tpu_custom_call.1} parent=23 // pred_region
          %s214 = sand.u32 %s52, 1
          %s215 = scalar_lea.sflag [#allocation4], %s214
          %s216 = sand.u32 %s52, 1
          %s217 = smul.addr %s216, 24
          %s218 = scalar_lea.vmem [#allocation3], %s217
          %s220 = ssub.s32 384, 384
          %221 = vsyncadd %s215, %s220
          %s222 = smul.addr %s29, 6
          %s223 = smul.addr %s28, 6
          %s224 = sadd.s32 %s222, %s223
          %s225 = smul.addr %s224, 64
          %s226 = scalar_lea.hbm %s0, %s225
          %s227 = sshll.u32 %s218, 4
          %s228 = int_to_ptr.vmem [resolvable:$true] %s227
          %233 = dma.hbm_to_vmem [thread:$0]  %s226, 384, %s228, %s215, 192, 192, 12
        $region28: #{tpu_custom_call.1} parent=23 // pred_fallthru
          _
      $region24: #{tpu_custom_call.1} parent=5 // pred_fallthru
        _
      %p234 = scmp.le.s32.totalorder 1, %s21
      %p235 = scmp.lt.s32.totalorder %s21, 3
      %p236 = pnand %p234, %p235
      %p237 = pneg %p236
      // Predicated region
      $region29: #{tpu_custom_call.1} parent=5 // pred_check
        _
      $region30: #{tpu_custom_call.1} parent=5 // pred_check_branch
        %239 = sbr.rel (%p236) target = $region32
      $region31: #{tpu_custom_call.1} parent=5 // pred_region
        %s240 = ssub.s32 %s21, 1
        %s241 = sand.u32 %s55, 1
        %s242 = scalar_lea.sflag [#allocation4], %s241
        %s243 = sand.u32 %s55, 1
        %s244 = smul.addr %s243, 24
        %s245 = scalar_lea.vmem [#allocation3], %s244
        // Predicated region
        $region33: #{tpu_custom_call.1} parent=31 // pred_check
          %p246 = pneg %p68
        $region34: #{tpu_custom_call.1} parent=31 // pred_check_branch
          %248 = sbr.rel (%p246) target = $region36
        $region35: #{tpu_custom_call.1} parent=31 // pred_region
          %249 = dma.done %s242, 384
        $region36: #{tpu_custom_call.1} parent=31 // pred_fallthru
          _
        // Predicated region
        $region37: #{tpu_custom_call.1} parent=31 // pred_check
          %p250 = pneg %p94
        $region38: #{tpu_custom_call.1} parent=31 // pred_check_branch
          %252 = sbr.rel (%p250) target = $region40
        $region39: #{tpu_custom_call.1} parent=31 // pred_region
          %253 = dma.done [#allocation7], 128
        $region40: #{tpu_custom_call.1} parent=31 // pred_fallthru
          _
        %s254 = sand.u32 %s55, 1
        %s255 = scalar_lea.sflag [#allocation4], %s254
        %s256 = sand.u32 %s55, 1
        %s257 = smul.addr %s256, 24
        %s258 = scalar_lea.vmem [#allocation3], %s257
        %p259 = pneg %p68
        %p260 = pneg %p65
        %p261 = pneg %p94
        %p262 = pneg %p91
        %p263 = pneg %p115
        %p264 = pneg %p112
        %p265 = pneg %p145
        %p266 = pneg %p142
        %s267 = sand.u32 %s132, 1
        %s268 = scalar_lea.sflag [#allocation5], %s267
        %s269 = sand.u32 %s132, 1
        %s270 = smul.addr %s269, 8
        %s271 = scalar_lea.vmem [#allocation8], %s270
        %p272 = pneg %p175
        %p273 = pneg %p172
        %s274 = sand.u32 %s162, 1
        %s275 = scalar_lea.sflag [#allocation10], %s274
        %s276 = sand.u32 %s162, 1
        %s277 = smul.addr %s276, 8
        %s278 = scalar_lea.vmem [#allocation9], %s277
        %v280 = vld [vmem:[%s245] sm:$0xff]
        %v281 = vld [vmem:[%s245 + $0x8] sm:$0xf]
        %v282 = vld [vmem:[%s245 + $0xc] sm:$0xff]
        %v283 = vld [vmem:[%s245 + $0x14] sm:$0xf]
        %v284 = vld [vmem:[%s2] sm:$0x7]
        %vm285 = vcmp.ne.s32.totalorder %v284, 0
        %v286 = vsel %vm285, 1, 0
        %v287 = vlaneseq
        %v288 = vshrl.u32 %v287, 7
        %v289 = vsub.s32 0, %v288
        %v290 = vrot.slane %v286, %v289
        %v291 = vlaneseq
        %v292 = vshrl.u32 %v291, 7
        %v293 = vsub.s32 1, %v292
        %v294 = vrot.slane %v286, %v293
        %v295 = vlaneseq
        %v296 = vshrl.u32 %v295, 7
        %v297 = vsub.s32 2, %v296
        %v298 = vrot.slane %v286, %v297
        %vm299 = vcmp.eq.s32.totalorder %v290, 1
        %vm300 = vcmp.eq.s32.totalorder %v294, 1
        %vm301 = vcmp.eq.s32.totalorder %v298, 1
        %vm302 = vmpackc.low %vm300, %vm299
        %vm303 = vmpackc.low %vm301, %vm301
        %v304 = vsel %vm302, %v280, 0
        %v305 = vsel %vm303, %v281, 0
        %v306 = vsel %vm302, %v282, 0
        %v307 = vsel %vm303, %v283, 0
        %vm308 = vcmp.ne.s32.totalorder %v284, 1
        %v309 = vsel %vm308, 1, 0
        %v310 = vlaneseq
        %v311 = vshrl.u32 %v310, 7
        %v312 = vsub.s32 0, %v311
        %v313 = vrot.slane %v309, %v312
        %v314 = vlaneseq
        %v315 = vshrl.u32 %v314, 7
        %v316 = vsub.s32 1, %v315
        %v317 = vrot.slane %v309, %v316
        %v318 = vlaneseq
        %v319 = vshrl.u32 %v318, 7
        %v320 = vsub.s32 2, %v319
        %v321 = vrot.slane %v309, %v320
        %vm322 = vcmp.eq.s32.totalorder %v313, 1
        %vm323 = vcmp.eq.s32.totalorder %v317, 1
        %vm324 = vcmp.eq.s32.totalorder %v321, 1
        %vm325 = vmpackc.low %vm323, %vm322
        %vm326 = vmpackc.low %vm324, %vm324
        %v327 = vsel %vm325, %v280, 0
        %v328 = vsel %vm326, %v281, 0
        %v329 = vsel %vm325, %v282, 0
        %v330 = vsel %vm326, %v283, 0
        %v333 = vunpack.c.l.b16 %v304
        %v334 = vunpack.c.h.b16 %v304
        %v335 = vunpack.c.l.b16 %v306
        %v336 = vunpack.c.h.b16 %v306
        %v337 = vpack.c.b16 %v335, %v333
        %v338 = vpack.c.b16 %v336, %v334
        %341 = vst [vmem:[#allocation2] sm:$0xff] %v337
        %342 = vst [vmem:[#allocation2 + $0x8] sm:$0xff] %v338
        %v347 = vunpack.c.l.b16 %v280
        %v348 = vunpack.c.h.b16 %v280
        %v349 = vunpack.c.l.b16 %v281
        %v350 = vunpack.c.l.b16 %v282
        %v351 = vunpack.c.h.b16 %v282
        %v352 = vunpack.c.l.b16 %v283
        %v353 = vpack.c.b16 %v350, %v347
        %v354 = vpack.c.b16 %v351, %v348
        %v355 = vpack.c.b16 %v352, %v349
        %356 = vrot.lane.b32.xlu0 %v353, 127
        %v357 = vpop.permute.xlu0 %356
        %358 = vrot.lane.b32.xlu0 %v354, 127
        %v359 = vpop.permute.xlu0 %358
        %360 = vrot.lane.b32.xlu0 %v355, 127
        %v361 = vpop.permute.xlu0 %360
        %vm362 = vcmask 1039360
        %v363 = vsel %vm362, %v357, %v359
        %v364 = vsel %vm362, %v359, %v361
        %367 = vst [vmem:[#allocation2 + $0x10] sm:$0xff] %v363
        %368 = vst [vmem:[#allocation2 + $0x18] sm:$0xff] %v364
        %v373 = vunpack.c.l.b16 %v327
        %v374 = vunpack.c.h.b16 %v327
        %v375 = vunpack.c.l.b16 %v328
        %v376 = vunpack.c.l.b16 %v329
        %v377 = vunpack.c.h.b16 %v329
        %v378 = vunpack.c.l.b16 %v330
        %v379 = vpack.c.b16 %v376, %v373
        %v380 = vpack.c.b16 %v377, %v374
        %v381 = vpack.c.b16 %v378, %v375
        %382 = vrot.lane.b32.xlu0 %v379, 126
        %v383 = vpop.permute.xlu0 %382
        %384 = vrot.lane.b32.xlu0 %v380, 126
        %v385 = vpop.permute.xlu0 %384
        %386 = vrot.lane.b32.xlu0 %v381, 126
        %v387 = vpop.permute.xlu0 %386
        %vm388 = vcmask 1031168
        %v389 = vsel %vm388, %v383, %v385
        %v390 = vsel %vm388, %v385, %v387
        %393 = vst [vmem:[#allocation2 + $0x20] sm:$0xff] %v389
        %394 = vst [vmem:[#allocation2 + $0x28] sm:$0xff] %v390
        %v397 = vunpack.c.l.b16 %v305
        %v398 = vunpack.c.l.b16 %v307
        %v399 = vpack.c.b16 %v398, %v397
        %400 = vrot.lane.b32.xlu0 %v337, 112
        %v401 = vpop.permute.xlu0 %400
        %402 = vrot.lane.b32.xlu0 %v338, 112
        %v403 = vpop.permute.xlu0 %402
        %404 = vrot.lane.b32.xlu0 %v399, 112
        %v405 = vpop.permute.xlu0 %404
        %vm406 = vcmask 916480
        %v407 = vsel %vm406, %v401, %v403
        %v408 = vsel %vm406, %v403, %v405
        %411 = vst [vmem:[#allocation2 + $0x30] sm:$0xff] %v407
        %412 = vst [vmem:[#allocation2 + $0x38] sm:$0xff] %v408
        %413 = vrot.lane.b32.xlu0 %v353, 111
        %v414 = vpop.permute.xlu0 %413
        %415 = vrot.lane.b32.xlu0 %v354, 111
        %v416 = vpop.permute.xlu0 %415
        %417 = vrot.lane.b32.xlu0 %v355, 111
        %v418 = vpop.permute.xlu0 %417
        %vm419 = vcmask 908288
        %v420 = vsel %vm419, %v414, %v416
        %v421 = vsel %vm419, %v416, %v418
        %424 = vst [vmem:[#allocation2 + $0x40] sm:$0xff] %v420
        %425 = vst [vmem:[#allocation2 + $0x48] sm:$0xff] %v421
        %426 = vrot.lane.b32.xlu0 %v379, 110
        %v427 = vpop.permute.xlu0 %426
        %428 = vrot.lane.b32.xlu0 %v380, 110
        %v429 = vpop.permute.xlu0 %428
        %430 = vrot.lane.b32.xlu0 %v381, 110
        %v431 = vpop.permute.xlu0 %430
        %vm432 = vcmask 900096
        %v433 = vsel %vm432, %v427, %v429
        %v434 = vsel %vm432, %v429, %v431
        %437 = vst [vmem:[#allocation2 + $0x50] sm:$0xff] %v433
        %438 = vst [vmem:[#allocation2 + $0x58] sm:$0xff] %v434
        %439 = vrot.lane.b32.xlu0 %v337, 96
        %v440 = vpop.permute.xlu0 %439
        %441 = vrot.lane.b32.xlu0 %v338, 96
        %v442 = vpop.permute.xlu0 %441
        %443 = vrot.lane.b32.xlu0 %v399, 96
        %v444 = vpop.permute.xlu0 %443
        %vm445 = vcmask 785408
        %v446 = vsel %vm445, %v440, %v442
        %v447 = vsel %vm445, %v442, %v444
        %450 = vst [vmem:[#allocation2 + $0x60] sm:$0xff] %v446
        %451 = vst [vmem:[#allocation2 + $0x68] sm:$0xff] %v447
        %452 = vrot.lane.b32.xlu0 %v353, 95
        %v453 = vpop.permute.xlu0 %452
        %454 = vrot.lane.b32.xlu0 %v354, 95
        %v455 = vpop.permute.xlu0 %454
        %456 = vrot.lane.b32.xlu0 %v355, 95
        %v457 = vpop.permute.xlu0 %456
        %vm458 = vcmask 777216
        %v459 = vsel %vm458, %v453, %v455
        %v460 = vsel %vm458, %v455, %v457
        %463 = vst [vmem:[#allocation2 + $0x70] sm:$0xff] %v459
        %464 = vst [vmem:[#allocation2 + $0x78] sm:$0xff] %v460
        %465 = vrot.lane.b32.xlu0 %v379, 94
        %v466 = vpop.permute.xlu0 %465
        %467 = vrot.lane.b32.xlu0 %v380, 94
        %v468 = vpop.permute.xlu0 %467
        %469 = vrot.lane.b32.xlu0 %v381, 94
        %v470 = vpop.permute.xlu0 %469
        %vm471 = vcmask 769024
        %v472 = vsel %vm471, %v466, %v468
        %v473 = vsel %vm471, %v468, %v470
        %476 = vst [vmem:[#allocation2 + $0x80] sm:$0xff] %v472
        %477 = vst [vmem:[#allocation2 + $0x88] sm:$0xff] %v473
        %v478 = vld [vmem:[#allocation6] sm:$0xff]
        %v479 = vld [vmem:[#allocation2] sm:$0xff]
        %v480 = vld [vmem:[#allocation2 + $0x8] sm:$0xff]
        %v481 = vld [vmem:[#allocation2 + $0x10] sm:$0xff]
        %v482 = vld [vmem:[#allocation2 + $0x18] sm:$0xff]
        %v483 = vld [vmem:[#allocation2 + $0x20] sm:$0xff]
        %v484 = vld [vmem:[#allocation2 + $0x28] sm:$0xff]
        %v485 = vld [vmem:[#allocation2 + $0x30] sm:$0xff]
        %v486 = vld [vmem:[#allocation2 + $0x38] sm:$0xff]
        %v487 = vld [vmem:[#allocation2 + $0x40] sm:$0xff]
        %v488 = vld [vmem:[#allocation2 + $0x48] sm:$0xff]
        %v489 = vld [vmem:[#allocation2 + $0x50] sm:$0xff]
        %v490 = vld [vmem:[#allocation2 + $0x58] sm:$0xff]
        %v491 = vld [vmem:[#allocation2 + $0x60] sm:$0xff]
        %v492 = vld [vmem:[#allocation2 + $0x68] sm:$0xff]
        %v493 = vld [vmem:[#allocation2 + $0x70] sm:$0xff]
        %v494 = vld [vmem:[#allocation2 + $0x78] sm:$0xff]
        %v495 = vld [vmem:[#allocation2 + $0x80] sm:$0xff]
        %v496 = vld [vmem:[#allocation2 + $0x88] sm:$0xff]
        %v498 = vunpack.c.l.b16 %v478
        %v499 = vunpack.c.h.b16 %v478
        %v500 = vpack.c.b16 %v498, %v498
        %v501 = vpack.c.b16 %v499, %v499
        %vm503 = vcmask 130048
        %v505 = vsel %vm503, %v501, 0
        %507 = vmatprep.subr.bf16.mxu0 %v480
        %508 = vmatpush1.bf16.msra.mxu0 %v479
        %509 = vmatprep.subr.bf16.mxu0 %v482
        %510 = vmatpush1.bf16.msra.mxu0 %v481
        %511 = vmatprep.subr.bf16.mxu0 %v484
        %512 = vmatpush1.bf16.msra.mxu0 %v483
        %513 = vmatprep.subr.bf16.mxu0 %v486
        %514 = vmatpush1.bf16.msra.mxu0 %v485
        %515 = vmatprep.subr.bf16.mxu0 %v488
        %516 = vmatpush1.bf16.msra.mxu0 %v487
        %517 = vmatprep.subr.bf16.mxu0 %v490
        %518 = vmatpush1.bf16.msra.mxu0 %v489
        %519 = vmatprep.subr.bf16.mxu0 %v492
        %520 = vmatpush1.bf16.msra.mxu0 %v491
        %521 = vmatprep.subr.bf16.mxu0 %v494
        %522 = vmatpush1.bf16.msra.mxu0 %v493
        %523 = vmatprep.subr.bf16.mxu0 %v496
        %524 = vmatpush1.bf16.msra.mxu0 %v495
        %525 = vmatprep.subr.bf16.mxu0 0
        %526 = vmatpush1.bf16.msra.mxu0 0
        %527 = vmatprep.subr.bf16.mxu0 0
        %528 = vmatpush1.bf16.msra.mxu0 0
        %529 = vmatprep.subr.bf16.mxu0 0
        %530 = vmatpush1.bf16.msra.mxu0 0
        %531 = vmatprep.subr.bf16.mxu0 0
        %532 = vmatpush1.bf16.msra.mxu0 0
        %533 = vmatprep.subr.bf16.mxu0 0
        %534 = vmatpush1.bf16.msra.mxu0 0
        %535 = vmatprep.subr.bf16.mxu0 0
        %536 = vmatpush1.bf16.msra.mxu0 0
        %537 = vmatprep.subr.bf16.mxu0 0
        %538 = vmatpush1.bf16.msra.mxu0 0
        %539 = vmatprep.mubr.bf16.mxu0 %v505
        %540 = vmatmul.mubr.bf16.gmra.mrb[0].mxu0 %v500
        %v541 = vpop.f32.mrb[0].mxu0
        %v542 = vadd.f32 0.0, %v541
        %v543 = vpop.f32.mrb[0].mxu0
        %v544 = vadd.f32 0.0, %v543
        %v545 = vpop.f32.mrb[0].mxu0
        %v546 = vpop.f32.mrb[0].mxu0
        %547 = vdwg.mxu0
        %v548 = vadd.f32 %v542, %v544
        %549 = vadd.xlane.f32.xlu0 %v548
        %v550 = vpop.xlane.xlu0 %549
        %551 = vst [vmem:[%s271] sm:$0xff] %v550
        %v552 = vmul.f32 %v542, %v542
        %v553 = vmul.f32 %v544, %v544
        %v554 = vadd.f32 %v552, %v553
        %555 = vadd.xlane.f32.xlu0 %v554
        %v556 = vpop.xlane.xlu0 %555
        %557 = vst [vmem:[%s278] sm:$0xff] %v556
        %s558 = sand.u32 %s132, 1
        %s559 = scalar_lea.sflag [#allocation5], %s558
        %s560 = sand.u32 %s132, 1
        %s561 = smul.addr %s560, 8
        %s562 = scalar_lea.vmem [#allocation8], %s561
        %s563 = sand.u32 %s162, 1
        %s564 = scalar_lea.sflag [#allocation10], %s563
        %s565 = sand.u32 %s162, 1
        %s566 = smul.addr %s565, 8
        %s567 = scalar_lea.vmem [#allocation9], %s566
        // Predicated region
        $region41: #{tpu_custom_call.1} parent=31 // pred_check
          %p568 = pneg %p142
        $region42: #{tpu_custom_call.1} parent=31 // pred_check_branch
          %570 = sbr.rel (%p568) target = $region44
        $region43: #{tpu_custom_call.1} parent=31 // pred_region
          %s572 = ssub.s32 128, 128
          %573 = vsyncadd %s559, %s572
          %s574 = sadd.s32 %s33, %s32
          %s575 = sadd.s32 %s574, %s31
          %s576 = smul.addr %s575, 128
          %s577 = scalar_lea.hbm %s3, %s576
          %s579 = sshll.u32 %s562, 4
          %s580 = int_to_ptr.vmem [resolvable:$true] %s579
          %582 = dma.vmem_to_hbm [thread:$0]  %s580, 128, %s577, %s559
        $region44: #{tpu_custom_call.1} parent=31 // pred_fallthru
          _
        // Predicated region
        $region45: #{tpu_custom_call.1} parent=31 // pred_check
          %p583 = pneg %p172
        $region46: #{tpu_custom_call.1} parent=31 // pred_check_branch
          %585 = sbr.rel (%p583) target = $region48
        $region47: #{tpu_custom_call.1} parent=31 // pred_region
          %s587 = ssub.s32 128, 128
          %588 = vsyncadd %s564, %s587
          %s589 = sadd.s32 %s33, %s32
          %s590 = sadd.s32 %s589, %s31
          %s591 = smul.addr %s590, 128
          %s592 = scalar_lea.hbm %s4, %s591
          %s594 = sshll.u32 %s567, 4
          %s595 = int_to_ptr.vmem [resolvable:$true] %s594
          %597 = dma.vmem_to_hbm [thread:$0]  %s595, 128, %s592, %s564
        $region48: #{tpu_custom_call.1} parent=31 // pred_fallthru
          _
      $region32: #{tpu_custom_call.1} parent=5 // pred_fallthru
        _
      %p598 = scmp.le.s32.totalorder 2, %s21
      // Predicated region
      $region49: #{tpu_custom_call.1} parent=5 // pred_check
        %p599 = pneg %p598
      $region50: #{tpu_custom_call.1} parent=5 // pred_check_branch
        %601 = sbr.rel (%p599) target = $region52
      $region51: #{tpu_custom_call.1} parent=5 // pred_region
        %s602 = ssub.s32 %s21, 2
        // Predicated region
        $region53: #{tpu_custom_call.1} parent=51 // pred_check
          %p603 = pneg %p148
        $region54: #{tpu_custom_call.1} parent=51 // pred_check_branch
          %605 = sbr.rel (%p603) target = $region56
        $region55: #{tpu_custom_call.1} parent=51 // pred_region
          %s606 = sand.u32 %s133, 1
          %s607 = scalar_lea.sflag [#allocation5], %s606
          %s608 = sand.u32 %s133, 1
          %s609 = smul.addr %s608, 8
          %s610 = scalar_lea.vmem [#allocation8], %s609
          %611 = dma.done %s607, 128
        $region56: #{tpu_custom_call.1} parent=51 // pred_fallthru
          _
        // Predicated region
        $region57: #{tpu_custom_call.1} parent=51 // pred_check
          %p612 = pneg %p178
        $region58: #{tpu_custom_call.1} parent=51 // pred_check_branch
          %614 = sbr.rel (%p612) target = $region60
        $region59: #{tpu_custom_call.1} parent=51 // pred_region
          %s615 = sand.u32 %s163, 1
          %s616 = scalar_lea.sflag [#allocation10], %s615
          %s617 = sand.u32 %s163, 1
          %s618 = smul.addr %s617, 8
          %s619 = scalar_lea.vmem [#allocation9], %s618
          %620 = dma.done %s616, 128
        $region60: #{tpu_custom_call.1} parent=51 // pred_fallthru
          _
      $region52: #{tpu_custom_call.1} parent=5 // pred_fallthru
        _
    $region6: #{tpu_custom_call.1} parent=1 // loop_footer
      %s25 = sadd.s32 1, %s21
    $region7: #{tpu_custom_call.1} parent=1 // loop_footer_branch
      %20 = sbr.rel target = $region3
    $region8: #{tpu_custom_call.1} parent=1 // loop_exit
      _
    %621 = vsyncpa [#allocation4], 1
    %s622 = scalar_lea.sflag [#allocation4], 1
    %623 = vsyncpa %s622, 1
    %624 = vsyncpa [#allocation7], 1
    %625 = vsyncpa [#allocation5], 1
    %s626 = scalar_lea.sflag [#allocation5], 1
    %627 = vsyncpa %s626, 1
    %628 = vsyncpa [#allocation10], 1
    %s629 = scalar_lea.sflag [#allocation10], 1
    %630 = vsyncpa %s629, 1

</llo_original>
